<compile_context>
chip_gen: v7x
topology: tpu7x:2x2x1
jax: 0.10.0
libtpu: 0.0.40
codegen_flags: <defaults>
</compile_context>

<pallas_src>
import functools

import jax
import jax.numpy as jnp
import numpy as np
from jax.experimental import pallas as pl
from jax.experimental.pallas import tpu as pltpu


def _groupnorm_kernel(x_ref, w_ref, b_ref, o_ref, *, eps, count):
    # x_ref: (1, 1, R, L)  one (sample, group) slab
    # w_ref, b_ref: (1, R, 1)  per-row affine (row = channel or channel-chunk)
    x = x_ref[0, 0].astype(jnp.float32)          # (R, L), f32 accumulation
    inv_count = jnp.float32(1.0 / count)

    # single pass: sum and sum-of-squares
    s = jnp.sum(x)
    ss = jnp.sum(x * x)
    mean = s * inv_count
    var = jnp.maximum(ss * inv_count - mean * mean, 0.0)
    inv = jax.lax.rsqrt(var + jnp.float32(eps))

    w = w_ref[0]                                  # (R, 1) f32
    b = b_ref[0]                                  # (R, 1) f32
    scale = w * inv                               # (R, 1)
    shift = b - mean * scale                      # (R, 1)

    o_ref[0, 0] = (x * scale + shift).astype(o_ref.dtype)


def group_norm_pallas(x, weight, bias, num_groups, eps=1e-5):
    """GroupNorm forward matching torch.nn.functional.group_norm.

    x: (N, C, H, W), weight/bias: (C,)
    """
    N, C, H, W = x.shape
    G = num_groups
    assert C % G == 0
    Cg = C // G
    HW = H * W

    w_f32 = weight.astype(jnp.float32).reshape(G, Cg)
    b_f32 = bias.astype(jnp.float32).reshape(G, Cg)

    if HW % 128 == 0:
        # fast path: lane-dense slab, channel boundaries align to 128-lane rows
        L = 128
        R = (Cg * HW) // 128
        rows_per_ch = HW // 128
        x4 = x.reshape(N, G, R, L)
        w2 = jnp.repeat(w_f32, rows_per_ch, axis=1).reshape(G, R, 1)
        b2 = jnp.repeat(b_f32, rows_per_ch, axis=1).reshape(G, R, 1)
    else:
        # TODO(synk): pad HW to a multiple of 128 and mask the tail out of the
        # sum/sumsq counts instead of shipping a non-lane-dense last dim.
        R, L = Cg, HW
        x4 = x.reshape(N, G, R, L)
        w2 = w_f32.reshape(G, Cg, 1)
        b2 = b_f32.reshape(G, Cg, 1)

    cp_kwargs = dict(dimension_semantics=("parallel", "parallel"))
    itemsize = jnp.dtype(x.dtype).itemsize
    blk_bytes = R * L * itemsize
    # double-buffered input + output blocks, plus the small w/b tiles
    vmem_needed = 4 * blk_bytes + 4 * R * 4 * 2
    if vmem_needed > (12 << 20):
        # TODO(synk): for very large groups (> ~4 MiB/block) add an inner HW
        # chunking grid axis ("arbitrary") with sum/sumsq scratch instead of
        # only raising the scoped-VMEM limit.
        cp_kwargs["vmem_limit_bytes"] = int(min(2 * vmem_needed, 96 << 20))

    out = pl.pallas_call(
        functools.partial(_groupnorm_kernel, eps=eps, count=float(Cg * HW)),
        out_shape=jax.ShapeDtypeStruct((N, G, R, L), x.dtype),
        grid=(N, G),
        in_specs=[
            pl.BlockSpec((1, 1, R, L), lambda n, g: (n, g, 0, 0)),
            pl.BlockSpec((1, R, 1), lambda n, g: (g, 0, 0)),
            pl.BlockSpec((1, R, 1), lambda n, g: (g, 0, 0)),
        ],
        out_specs=pl.BlockSpec((1, 1, R, L), lambda n, g: (n, g, 0, 0)),
        compiler_params=pltpu.CompilerParams(**cp_kwargs),
    )(x4, w2, b2)

    return out.reshape(N, C, H, W)


class GroupNorm:
    """Mirror of the PyTorch module's __init__ / forward."""

    def __init__(self, num_channels, num_groups=32, min_channels_per_group=4,
                 eps=1e-5):
        self.num_groups = min(num_groups, num_channels // min_channels_per_group)
        self.eps = eps
        # deterministic init, same as torch: ones / zeros
        self.weight = jnp.ones((num_channels,), dtype=jnp.float32)
        self.bias = jnp.zeros((num_channels,), dtype=jnp.float32)

    def __call__(self, x):
        return group_norm_pallas(x, self.weight, self.bias,
                                 num_groups=self.num_groups, eps=self.eps)


def _group_norm_ref(x, weight, bias, num_groups, eps):
    # pure-JAX reference for validation
    N, C, H, W = x.shape
    G = num_groups
    xr = x.reshape(N, G, -1).astype(jnp.float32)
    mean = xr.mean(axis=2, keepdims=True)
    var = ((xr - mean) ** 2).mean(axis=2, keepdims=True)
    xn = ((xr - mean) / jnp.sqrt(var + eps)).reshape(N, C, H, W)
    out = xn * weight[None, :, None, None] + bias[None, :, None, None]
    return out.astype(x.dtype)


if __name__ == "__main__":
    key = jax.random.PRNGKey(0)
    N, C, H, W = 2, 16, 16, 16  # num_groups = min(32, 16 // 4) = 4
    x = jax.random.normal(key, (N, C, H, W), dtype=jnp.float32)

    gn = GroupNorm(num_channels=C)
    # give the affine params non-trivial deterministic values to exercise them
    kw, kb = jax.random.split(jax.random.PRNGKey(1))
    gn.weight = 1.0 + 0.1 * jax.random.normal(kw, (C,), dtype=jnp.float32)
    gn.bias = 0.1 * jax.random.normal(kb, (C,), dtype=jnp.float32)

    out = gn(x)
    out = jax.block_until_ready(out)

    ref = _group_norm_ref(x, gn.weight, gn.bias, gn.num_groups, gn.eps)
    np.testing.assert_allclose(np.asarray(out), np.asarray(ref),
                               rtol=1e-4, atol=1e-4)
    print("KERNEL_OK")
</pallas_src>

<mosaic_0001>
module attributes {stable_mosaic.version = 11 : i64} {
  func.func @_groupnorm_kernel(%arg0: i32, %arg1: i32, %arg2: memref<1x1x8x128xf32, #tpu.memory_space<vmem>>, %arg3: memref<1x8x1xf32, #tpu.memory_space<vmem>>, %arg4: memref<1x8x1xf32, #tpu.memory_space<vmem>>, %arg5: memref<1x1x8x128xf32, #tpu.memory_space<vmem>>) attributes {dimension_semantics = [#tpu.dimension_semantics<parallel>, #tpu.dimension_semantics<parallel>], iteration_bounds = array<i64: 2, 4>, scalar_prefetch = 0 : i64, scratch_operands = 0 : i64, tpu.core_type = #tpu.core_type<tc>, window_params = [{transform_indices = @transform_0, window_bounds = array<i64: 1, 1, 8, 128>}, {transform_indices = @transform_1, window_bounds = array<i64: 1, 8, 1>}, {transform_indices = @transform_2, window_bounds = array<i64: 1, 8, 1>}, {transform_indices = @transform_3, window_bounds = array<i64: 1, 1, 8, 128>}]} {
    %c0 = arith.constant 0 : index
    %c0_0 = arith.constant 0 : index
    %c0_1 = arith.constant 0 : index
    %c0_2 = arith.constant 0 : index
    %0 = vector.load %arg2[%c0, %c0_0, %c0_1, %c0_2] : memref<1x1x8x128xf32, #tpu.memory_space<vmem>>, vector<1x1x8x128xf32>
    %1 = vector.shape_cast %0 : vector<1x1x8x128xf32> to vector<8x128xf32>
    %2 = vector.shape_cast %1 : vector<8x128xf32> to vector<1x8x128xf32>
    %cst = arith.constant dense<0.000000e+00> : vector<1xf32>
    %3 = vector.multi_reduction <add>, %2, %cst [1, 2] : vector<1x8x128xf32> to vector<1xf32>
    %4 = vector.shape_cast %3 : vector<1xf32> to vector<1x1x1xf32>
    %5 = vector.extract %4[0, 0, 0] : f32 from vector<1x1x1xf32>
    %6 = arith.mulf %1, %1 : vector<8x128xf32>
    %7 = vector.shape_cast %6 : vector<8x128xf32> to vector<1x8x128xf32>
    %cst_3 = arith.constant dense<0.000000e+00> : vector<1xf32>
    %8 = vector.multi_reduction <add>, %7, %cst_3 [1, 2] : vector<1x8x128xf32> to vector<1xf32>
    %9 = vector.shape_cast %8 : vector<1xf32> to vector<1x1x1xf32>
    %10 = vector.extract %9[0, 0, 0] : f32 from vector<1x1x1xf32>
    %cst_4 = arith.constant 9.765625E-4 : f32
    %11 = arith.mulf %5, %cst_4 : f32
    %cst_5 = arith.constant 9.765625E-4 : f32
    %12 = arith.mulf %10, %cst_5 : f32
    %13 = arith.mulf %11, %11 : f32
    %14 = arith.subf %12, %13 : f32
    %cst_6 = arith.constant 0.000000e+00 : f32
    %15 = arith.maximumf %14, %cst_6 : f32
    %cst_7 = arith.constant 9.99999974E-6 : f32
    %16 = arith.addf %15, %cst_7 : f32
    %17 = math.rsqrt %16 : f32
    %c0_8 = arith.constant 0 : index
    %c0_9 = arith.constant 0 : index
    %c0_10 = arith.constant 0 : index
    %18 = vector.load %arg3[%c0_8, %c0_9, %c0_10] : memref<1x8x1xf32, #tpu.memory_space<vmem>>, vector<1x8x1xf32>
    %19 = vector.shape_cast %18 : vector<1x8x1xf32> to vector<8x1xf32>
    %c0_11 = arith.constant 0 : index
    %c0_12 = arith.constant 0 : index
    %c0_13 = arith.constant 0 : index
    %20 = vector.load %arg4[%c0_11, %c0_12, %c0_13] : memref<1x8x1xf32, #tpu.memory_space<vmem>>, vector<1x8x1xf32>
    %21 = vector.shape_cast %20 : vector<1x8x1xf32> to vector<8x1xf32>
    %22 = vector.broadcast %17 : f32 to vector<8x1xf32>
    %23 = arith.mulf %19, %22 : vector<8x1xf32>
    %24 = vector.broadcast %11 : f32 to vector<8x1xf32>
    %25 = arith.mulf %24, %23 : vector<8x1xf32>
    %26 = arith.subf %21, %25 : vector<8x1xf32>
    %27 = vector.broadcast %23 : vector<8x1xf32> to vector<8x128xf32>
    %28 = arith.mulf %1, %27 : vector<8x128xf32>
    %29 = vector.broadcast %26 : vector<8x1xf32> to vector<8x128xf32>
    %30 = arith.addf %28, %29 : vector<8x128xf32>
    %c0_14 = arith.constant 0 : index
    %c0_15 = arith.constant 0 : index
    %c0_16 = arith.constant 0 : index
    %c0_17 = arith.constant 0 : index
    %31 = vector.load %arg5[%c0_14, %c0_15, %c0_16, %c0_17] : memref<1x1x8x128xf32, #tpu.memory_space<vmem>>, vector<1x1x8x128xf32>
    %32 = vector.shape_cast %31 : vector<1x1x8x128xf32> to vector<8x128xf32>
    %33 = vector.shape_cast %30 : vector<8x128xf32> to vector<1x1x8x128xf32>
    tpu.vector_store %arg5[%c0_14, %c0_15, %c0_16, %c0_17], %33 {strides = array<i32>} : memref<1x1x8x128xf32, #tpu.memory_space<vmem>>, vector<1x1x8x128xf32>,
    return
  }
  func.func @transform_0(%arg0: i32, %arg1: i32) -> (i32, i32, i32, i32) {
    %c0_i32 = arith.constant 0 : i32
    %c0_i32_0 = arith.constant 0 : i32
    %c0_i32_1 = arith.constant 0 : i32
    return %arg0, %arg1, %c0_i32, %c0_i32_0 : i32, i32, i32, i32
  }
  func.func @transform_1(%arg0: i32, %arg1: i32) -> (i32, i32, i32) {
    %c0_i32 = arith.constant 0 : i32
    %c0_i32_0 = arith.constant 0 : i32
    %c0_i32_1 = arith.constant 0 : i32
    return %arg1, %c0_i32, %c0_i32_0 : i32, i32, i32
  }
  func.func @transform_2(%arg0: i32, %arg1: i32) -> (i32, i32, i32) {
    %c0_i32 = arith.constant 0 : i32
    %c0_i32_0 = arith.constant 0 : i32
    %c0_i32_1 = arith.constant 0 : i32
    return %arg1, %c0_i32, %c0_i32_0 : i32, i32, i32
  }
  func.func @transform_3(%arg0: i32, %arg1: i32) -> (i32, i32, i32, i32) {
    %c0_i32 = arith.constant 0 : i32
    %c0_i32_0 = arith.constant 0 : i32
    %c0_i32_1 = arith.constant 0 : i32
    return %arg0, %arg1, %c0_i32, %c0_i32_0 : i32, i32, i32, i32
  }
}

</mosaic_0001>

<llo_original>
// kernel: tpu_custom_call.1
$region0: #{tpu_custom_call.1}
  #allocation0 [shape = 'u32[]', space=smem, size = 0x4, offset = 0x4, fixed_abs, tag = 'smem constant byte address 0x4 - core index']
  #allocation1 [shape = 'u32[144,128]{1,0:T(1,128)}', space=vmem, size = 0x12000, scoped, tag = 'internal scratch']
  %s0 = inlined_call_operand.vmem [shape: f32[2,4,8,128], index: 0, kind: input, shape index: {}]
  %s1 = inlined_call_operand.vmem [shape: f32[4,8,1], index: 1, kind: input, shape index: {}]
  %s2 = inlined_call_operand.vmem [shape: f32[4,8,1], index: 2, kind: input, shape index: {}]
  %s3 = inlined_call_operand.hbm [shape: f32[2,4,8,128], index: 3, kind: output, shape index: {}]
  %s4 = sld [smem:[#allocation0]]
  $region45: #{tpu_custom_call.1} parent=0
    _
  %s6 = ssub.s32 1, %s4
  %s7 = scalar_select 0, %s6, %s4
  $region1: #{tpu_custom_call.1} parent=0
    #allocation2 [shape = 'u8[8192]{0}', space=vmem, size = 0x2000, scoped, tag = 'output window, operand 0']
    #allocation3 [shape = 's32[2]{0}', space=sflag, size = 0x8, scoped, tag = 'scoped memory for tpu_custom_call.1']
    %8 = vsyncpa [#allocation3], 0
    %s9 = scalar_lea.sflag [#allocation3], 1
    %10 = vsyncpa %s9, 0
    loop: start=0, step=1, limit=10
    $region2: #{tpu_custom_call.1} parent=1 // loop_pre_header
      _
    $region3: #{tpu_custom_call.1} parent=1 // loop_header
      %s12 = sphi 0, %s16
      %p13 = scmp.ge.s32.totalorder %s12, 10
      %s19 = sphi 0, %s31
      %s20 = sphi 0, %s27
      %s21 = sphi 0, %s19
      %s22 = sphi 0, %s20
      %s23 = sphi 0, %s21
      %s24 = sphi 0, %s22
      %s36 = sphi 0, %s38
      %s39 = sphi 0, %s36
      %s40 = sphi 0, %s39
      %s56 = sphi 0, %s40
      %s62 = sphi 0, %s64
      %s65 = sphi 0, %s62
      %s66 = sphi 0, %s65
      %s82 = sphi 0, %s66
      %s88 = sphi 0, %s90
      %s91 = sphi 0, %s88
      %s92 = sphi 0, %s91
      %s108 = sphi 0, %s92
      %s116 = sphi 0, %s118
      %s119 = sphi 0, %s116
      %s120 = sphi 0, %s119
      %s136 = sphi 0, %s120
    $region4: #{tpu_custom_call.1} parent=1 // loop_header_branch
      %15 = sbr.rel (%p13) target = $region8
    $region5: #{tpu_custom_call.1} parent=1 // loop_body
      %s17 = ssub.s32 %s12, 1
      %s18 = ssub.s32 %s12, 2
      %s25 = sadd.s32 1, %s20
      %p26 = scmp.ge.s32.totalorder %s25, 4
      %s27 = scalar_select %p26, 0, %s25
      %s28 = sadd.s32 1, %s19
      %s29 = scalar_select %p26, %s28, %s19
      %p30 = scmp.ge.s32.totalorder %s29, 2
      %s31 = scalar_select %p30, 0, %s29
      %s32 = ssub.s32 %s19, %s31
      %s33 = ssub.s32 %s20, %s27
      %s34 = sor.u32 %s32, %s33
      %p35 = scmp.eq.s32.totalorder %s34, 0
      %s37 = sadd.s32 %s36, 1
      %s38 = scalar_select %p35, %s36, %s37
      %p41 = pneg %p35
      %p42 = scmp.eq.s32.totalorder %s12, 7
      %p43 = por %p41, %p42
      %p44 = scmp.ne.s32.totalorder %s36, %s39
      %p45 = scmp.eq.s32.totalorder %s12, 0
      %p46 = por %p44, %p45
      %p47 = scmp.ne.s32.totalorder %s36, %s39
      %p48 = scmp.eq.s32.totalorder %s17, 7
      %p49 = por %p47, %p48
      %p50 = scmp.ne.s32.totalorder %s39, %s40
      %p51 = scmp.eq.s32.totalorder %s17, 0
      %p52 = por %p50, %p51
      %p53 = scmp.ne.s32.totalorder %s39, %s40
      %p54 = scmp.eq.s32.totalorder %s18, 7
      %p55 = por %p53, %p54
      %p57 = scmp.ne.s32.totalorder %s40, %s56
      %p58 = scmp.eq.s32.totalorder %s18, 0
      %p59 = por %p57, %p58
      %s60 = ssub.s32 %s20, %s27
      %p61 = scmp.eq.s32.totalorder %s60, 0
      %s63 = sadd.s32 %s62, 1
      %s64 = scalar_select %p61, %s62, %s63
      %p67 = pneg %p61
      %p68 = scmp.eq.s32.totalorder %s12, 7
      %p69 = por %p67, %p68
      %p70 = scmp.ne.s32.totalorder %s62, %s65
      %p71 = scmp.eq.s32.totalorder %s12, 0
      %p72 = por %p70, %p71
      %p73 = scmp.ne.s32.totalorder %s62, %s65
      %p74 = scmp.eq.s32.totalorder %s17, 7
      %p75 = por %p73, %p74
      %p76 = scmp.ne.s32.totalorder %s65, %s66
      %p77 = scmp.eq.s32.totalorder %s17, 0
      %p78 = por %p76, %p77
      %p79 = scmp.ne.s32.totalorder %s65, %s66
      %p80 = scmp.eq.s32.totalorder %s18, 7
      %p81 = por %p79, %p80
      %p83 = scmp.ne.s32.totalorder %s66, %s82
      %p84 = scmp.eq.s32.totalorder %s18, 0
      %p85 = por %p83, %p84
      %s86 = ssub.s32 %s20, %s27
      %p87 = scmp.eq.s32.totalorder %s86, 0
      %s89 = sadd.s32 %s88, 1
      %s90 = scalar_select %p87, %s88, %s89
      %p93 = pneg %p87
      %p94 = scmp.eq.s32.totalorder %s12, 7
      %p95 = por %p93, %p94
      %p96 = scmp.ne.s32.totalorder %s88, %s91
      %p97 = scmp.eq.s32.totalorder %s12, 0
      %p98 = por %p96, %p97
      %p99 = scmp.ne.s32.totalorder %s88, %s91
      %p100 = scmp.eq.s32.totalorder %s17, 7
      %p101 = por %p99, %p100
      %p102 = scmp.ne.s32.totalorder %s91, %s92
      %p103 = scmp.eq.s32.totalorder %s17, 0
      %p104 = por %p102, %p103
      %p105 = scmp.ne.s32.totalorder %s91, %s92
      %p106 = scmp.eq.s32.totalorder %s18, 7
      %p107 = por %p105, %p106
      %p109 = scmp.ne.s32.totalorder %s92, %s108
      %p110 = scmp.eq.s32.totalorder %s18, 0
      %p111 = por %p109, %p110
      %s112 = ssub.s32 %s19, %s31
      %s113 = ssub.s32 %s20, %s27
      %s114 = sor.u32 %s112, %s113
      %p115 = scmp.eq.s32.totalorder %s114, 0
      %s117 = sadd.s32 %s116, 1
      %s118 = scalar_select %p115, %s116, %s117
      %p121 = pneg %p115
      %p122 = scmp.eq.s32.totalorder %s12, 7
      %p123 = por %p121, %p122
      %p124 = scmp.ne.s32.totalorder %s116, %s119
      %p125 = scmp.eq.s32.totalorder %s12, 0
      %p126 = por %p124, %p125
      %p127 = scmp.ne.s32.totalorder %s116, %s119
      %p128 = scmp.eq.s32.totalorder %s17, 7
      %p129 = por %p127, %p128
      %p130 = scmp.ne.s32.totalorder %s119, %s120
      %p131 = scmp.eq.s32.totalorder %s17, 0
      %p132 = por %p130, %p131
      %p133 = scmp.ne.s32.totalorder %s119, %s120
      %p134 = scmp.eq.s32.totalorder %s18, 7
      %p135 = por %p133, %p134
      %p137 = scmp.ne.s32.totalorder %s120, %s136
      %p138 = scmp.eq.s32.totalorder %s18, 0
      %p139 = por %p137, %p138
      %p140 = scmp.le.s32.totalorder 1, %s12
      %p141 = scmp.lt.s32.totalorder %s12, 9
      %p142 = pnand %p140, %p141
      %p143 = pneg %p142
      // Predicated region
      $region9: #{tpu_custom_call.1} parent=5 // pred_check
        _
      $region10: #{tpu_custom_call.1} parent=5 // pred_check_branch
        %145 = sbr.rel (%p142) target = $region12
      $region11: #{tpu_custom_call.1} parent=5 // pred_region
        %s146 = ssub.s32 %s12, 1
      $region12: #{tpu_custom_call.1} parent=5 // pred_fallthru
        _
      %p147 = scmp.lt.s32.totalorder %s12, 8
      // Predicated region
      $region13: #{tpu_custom_call.1} parent=5 // pred_check
        %p148 = pneg %p147
      $region14: #{tpu_custom_call.1} parent=5 // pred_check_branch
        %150 = sbr.rel (%p148) target = $region16
      $region15: #{tpu_custom_call.1} parent=5 // pred_region
        // Predicated region
        $region17: #{tpu_custom_call.1} parent=15 // pred_check
          %p151 = pneg %p46
        $region18: #{tpu_custom_call.1} parent=15 // pred_check_branch
          %153 = sbr.rel (%p151) target = $region20
        $region19: #{tpu_custom_call.1} parent=15 // pred_region
          %p154 = scmp.lt.s32.totalorder %s19, 1
          %s155 = scalar_select %p154, %s19, 1
          %p156 = scmp.lt.s32.totalorder %s20, 3
          %s157 = scalar_select %p156, %s20, 3
          %s158 = smul.addr %s155, 4
          %s159 = sadd.s32 %s157, %s158
          %s160 = smul.addr %s159, 8
          %s161 = scalar_lea.vmem %s0, %s160
        $region20: #{tpu_custom_call.1} parent=15 // pred_fallthru
          _
        // Predicated region
        $region21: #{tpu_custom_call.1} parent=15 // pred_check
          %p162 = pneg %p72
        $region22: #{tpu_custom_call.1} parent=15 // pred_check_branch
          %164 = sbr.rel (%p162) target = $region24
        $region23: #{tpu_custom_call.1} parent=15 // pred_region
          %p165 = scmp.lt.s32.totalorder %s20, 3
          %s166 = scalar_select %p165, %s20, 3
          %s167 = smul.addr %s166, 8
          %s168 = scalar_lea.vmem %s1, %s167
        $region24: #{tpu_custom_call.1} parent=15 // pred_fallthru
          _
        // Predicated region
        $region25: #{tpu_custom_call.1} parent=15 // pred_check
          %p169 = pneg %p98
        $region26: #{tpu_custom_call.1} parent=15 // pred_check_branch
          %171 = sbr.rel (%p169) target = $region28
        $region27: #{tpu_custom_call.1} parent=15 // pred_region
          %p172 = scmp.lt.s32.totalorder %s20, 3
          %s173 = scalar_select %p172, %s20, 3
          %s174 = smul.addr %s173, 8
          %s175 = scalar_lea.vmem %s2, %s174
        $region28: #{tpu_custom_call.1} parent=15 // pred_fallthru
          _
      $region16: #{tpu_custom_call.1} parent=5 // pred_fallthru
        _
      %p176 = scmp.le.s32.totalorder 1, %s12
      %p177 = scmp.lt.s32.totalorder %s12, 9
      %p178 = pnand %p176, %p177
      %p179 = pneg %p178
      // Predicated region
      $region29: #{tpu_custom_call.1} parent=5 // pred_check
        _
      $region30: #{tpu_custom_call.1} parent=5 // pred_check_branch
        %181 = sbr.rel (%p178) target = $region32
      $region31: #{tpu_custom_call.1} parent=5 // pred_region
        %s182 = ssub.s32 %s12, 1
        %p183 = scmp.lt.s32.totalorder %s21, 1
        %s184 = scalar_select %p183, %s21, 1
        %p185 = scmp.lt.s32.totalorder %s22, 3
        %s186 = scalar_select %p185, %s22, 3
        %s187 = smul.addr %s184, 4
        %s188 = sadd.s32 %s186, %s187
        %s189 = smul.addr %s188, 8
        %s190 = scalar_lea.vmem %s0, %s189
        %p191 = pneg %p52
        %p192 = pneg %p49
        %p193 = scmp.lt.s32.totalorder %s22, 3
        %s194 = scalar_select %p193, %s22, 3
        %s195 = smul.addr %s194, 8
        %s196 = scalar_lea.vmem %s1, %s195
        %p197 = pneg %p78
        %p198 = pneg %p75
        %p199 = scmp.lt.s32.totalorder %s22, 3
        %s200 = scalar_select %p199, %s22, 3
        %s201 = smul.addr %s200, 8
        %s202 = scalar_lea.vmem %s2, %s201
        %p203 = pneg %p104
        %p204 = pneg %p101
        %p205 = pneg %p132
        %p206 = pneg %p129
        %s207 = sand.u32 %s119, 1
        %s208 = scalar_lea.sflag [#allocation3], %s207
        %s209 = sand.u32 %s119, 1
        %s210 = smul.addr %s209, 8
        %s211 = scalar_lea.vmem [#allocation2], %s210
        %p212 = scmp.lt.s32.totalorder %s21, 1
        %s213 = scalar_select %p212, %s21, 1
        %p214 = scmp.lt.s32.totalorder %s22, 3
        %s215 = scalar_select %p214, %s22, 3
        %s216 = smul.addr %s213, 4
        %s217 = sadd.s32 %s215, %s216
        %s218 = smul.addr %s217, 8
        %s219 = scalar_lea.vmem %s0, %s218
        %p220 = scmp.lt.s32.totalorder %s22, 3
        %s221 = scalar_select %p220, %s22, 3
        %s222 = smul.addr %s221, 8
        %s223 = scalar_lea.vmem %s1, %s222
        %p224 = scmp.lt.s32.totalorder %s22, 3
        %s225 = scalar_select %p224, %s22, 3
        %s226 = smul.addr %s225, 8
        %s227 = scalar_lea.vmem %s2, %s226
        %v228 = vld [vmem:[%s219] sm:$0xff]
        %229 = vadd.xlane.f32.xlu0 %v228
        %v230 = vpop.xlane.xlu0 %229
        %v231 = vrot.slane %v230, 4
        %v232 = vadd.f32 %v230, %v231
        %v233 = vrot.slane %v232, 2
        %v234 = vadd.f32 %v232, %v233
        %v235 = vrot.slane %v234, 1
        %v236 = vadd.f32 %v234, %v235
        %s237 = vtos %v236
        %v238 = vmul.f32 %v228, %v228
        %239 = vadd.xlane.f32.xlu0 %v238
        %v240 = vpop.xlane.xlu0 %239
        %v241 = vrot.slane %v240, 4
        %v242 = vadd.f32 %v240, %v241
        %v243 = vrot.slane %v242, 2
        %v244 = vadd.f32 %v242, %v243
        %v245 = vrot.slane %v244, 1
        %v246 = vadd.f32 %v244, %v245
        %s247 = vtos %v246
        %s248 = smul.f32 %s237, 0.0009765625
        %s249 = smul.f32 %s247, 0.0009765625
        %s250 = smul.f32 %s248, %s248
        %s251 = ssub.f32 %s249, %s250
        %s252 = smax.f32 %s251, 0.0
        %s253 = sadd.f32 %s252, 1e-05
        %v254 = vstv %s253
        %v255 = vrsqrt.pop %v254
        %s256 = vtos %v255
        %v257 = vld [vmem:[%s223] sm:$0xff]
        %v258 = vld [vmem:[%s227] sm:$0xff]
        %v259 = vstv %s256
        %v260 = vmul.f32 %v257, %v259
        %v261 = vstv %s248
        %v262 = vmul.f32 %v261, %v260
        %v263 = vsub.f32 %v258, %v262
        %265 = vset.pattern.permute.xlu0 0
        %266 = vperm.xlu0 %265, %v260
        %v267 = vpop.permute.xlu0 %266
        %v269 = vmul.f32 %v228, %v267
        %271 = vset.pattern.permute.xlu0 0
        %272 = vperm.xlu0 %271, %v263
        %v273 = vpop.permute.xlu0 %272
        %v275 = vadd.f32 %v269, %v273
        %276 = vst [vmem:[%s211] sm:$0xff] %v275
        %s277 = sand.u32 %s119, 1
        %s278 = scalar_lea.sflag [#allocation3], %s277
        %s279 = sand.u32 %s119, 1
        %s280 = smul.addr %s279, 8
        %s281 = scalar_lea.vmem [#allocation2], %s280
        // Predicated region
        $region33: #{tpu_custom_call.1} parent=31 // pred_check
          %p282 = pneg %p129
        $region34: #{tpu_custom_call.1} parent=31 // pred_check_branch
          %284 = sbr.rel (%p282) target = $region36
        $region35: #{tpu_custom_call.1} parent=31 // pred_region
          %s286 = ssub.s32 128, 128
          %287 = vsyncadd %s278, %s286
          %s288 = smul.addr %s21, 4
          %s289 = sadd.s32 %s22, %s288
          %s290 = smul.addr %s289, 128
          %s291 = scalar_lea.hbm %s3, %s290
          %s293 = sshll.u32 %s281, 4
          %s294 = int_to_ptr.vmem [resolvable:$true] %s293
          %296 = dma.vmem_to_hbm [thread:$0]  %s294, 128, %s291, %s278
        $region36: #{tpu_custom_call.1} parent=31 // pred_fallthru
          _
      $region32: #{tpu_custom_call.1} parent=5 // pred_fallthru
        _
      %p297 = scmp.le.s32.totalorder 2, %s12
      // Predicated region
      $region37: #{tpu_custom_call.1} parent=5 // pred_check
        %p298 = pneg %p297
      $region38: #{tpu_custom_call.1} parent=5 // pred_check_branch
        %300 = sbr.rel (%p298) target = $region40
      $region39: #{tpu_custom_call.1} parent=5 // pred_region
        %s301 = ssub.s32 %s12, 2
        // Predicated region
        $region41: #{tpu_custom_call.1} parent=39 // pred_check
          %p302 = pneg %p135
        $region42: #{tpu_custom_call.1} parent=39 // pred_check_branch
          %304 = sbr.rel (%p302) target = $region44
        $region43: #{tpu_custom_call.1} parent=39 // pred_region
          %s305 = sand.u32 %s120, 1
          %s306 = scalar_lea.sflag [#allocation3], %s305
          %s307 = sand.u32 %s120, 1
          %s308 = smul.addr %s307, 8
          %s309 = scalar_lea.vmem [#allocation2], %s308
          %310 = dma.done %s306, 128
        $region44: #{tpu_custom_call.1} parent=39 // pred_fallthru
          _
      $region40: #{tpu_custom_call.1} parent=5 // pred_fallthru
        _
    $region6: #{tpu_custom_call.1} parent=1 // loop_footer
      %s16 = sadd.s32 1, %s12
    $region7: #{tpu_custom_call.1} parent=1 // loop_footer_branch
      %11 = sbr.rel target = $region3
    $region8: #{tpu_custom_call.1} parent=1 // loop_exit
      _
    %311 = vsyncpa [#allocation3], 1
    %s312 = scalar_lea.sflag [#allocation3], 1
    %313 = vsyncpa %s312, 1

</llo_original>
